<compile_context>
chip_gen: v7x
topology: tpu7x:2x2x1
jax: 0.10.0
libtpu: 0.0.40
codegen_flags: <defaults>
</compile_context>

<pallas_src>
import functools

import jax
import jax.numpy as jnp
import numpy as np
from jax.experimental import pallas as pl
from jax.experimental.pallas import tpu as pltpu


def _cost_builder_kernel(left_ref, right_ref, out_ref, *,
                         W: int, HW: int, TD: int, n_chunks: int):
    """One (batch b, disparity-chunk dc) grid step.

    Kernel views:
      left_ref, right_ref : (C, H*W)        features, lane axis = fused H*W
      out_ref             : (2, C, TD*H*W)  cost slab for disparities
                            [dc*TD, dc*TD + TD); slot 0 = left half,
                            slot 1 = right half.
    """
    left = left_ref[...].astype(out_ref.dtype)
    right = right_ref[...].astype(out_ref.dtype)

    C = left_ref.shape[0]
    # w-coordinate of every fused (h, w) lane; hoisted out of the disparity
    # loop (broadcast_in_dim is not CSE'd by JAX).
    w_idx = jax.lax.broadcasted_iota(jnp.int32, (C, HW), 1) % W
    zero = jnp.zeros((), dtype=out_ref.dtype)

    # When the whole disparity range fits in one chunk, shifts are static
    # Python ints -> static lane rotations and constant-folded masks.
    d_base = 0 if n_chunks == 1 else pl.program_id(1) * TD

    for i in range(TD):
        d = d_base + i
        lo = i * HW
        if isinstance(d, int) and d == 0:
            # Disparity 0 is a plain copy: no mask, no rotation.
            out_ref[0, :, lo:lo + HW] = left
            out_ref[1, :, lo:lo + HW] = right
        else:
            # right[..., w - d] realized as one XLU lane rotation (jnp.roll
            # semantics: out[p] = in[p - d]); wrapped-around elements only
            # land on masked (w < d) positions, zeroed by a cheap VPU select.
            mask = w_idx >= d
            right_shifted = pltpu.roll(right, shift=d, axis=1)
            out_ref[0, :, lo:lo + HW] = jnp.where(mask, left, zero)
            out_ref[1, :, lo:lo + HW] = jnp.where(mask, right_shifted, zero)


def cost_builder_forward(left_feats, right_feats, *, max_disp: int):
    B, C, H, W = left_feats.shape
    assert right_feats.shape == (B, C, H, W)
    D = max_disp // 4
    assert D >= 1, "max_disp // 4 must be >= 1"
    HW = H * W
    # TODO(synk): add a fallback block layout for H*W not a multiple of 128
    # (the lane-fused output slab then violates the (8,128) divisibility rule).
    assert HW % 128 == 0, "this kernel assumes H*W is a multiple of 128"

    # Free, metadata-only reshapes: fuse (H, W) into one lane-dense axis.
    left2 = left_feats.reshape(B, C, HW)
    right2 = right_feats.reshape(B, C, HW)

    out_dtype = jnp.float32  # torch.zeros default dtype in the reference module
    in_item = jnp.dtype(left_feats.dtype).itemsize
    out_item = jnp.dtype(out_dtype).itemsize

    # Largest divisor of D whose (double-buffered) output block stays well
    # inside scoped VMEM (budget per buffer ~8 MiB -> ~16 MiB double-buffered).
    budget_bytes = 8 * 1024 * 1024
    TD = 1
    for cand in range(D, 0, -1):
        if D % cand == 0 and 2 * C * cand * HW * out_item <= budget_bytes:
            TD = cand
            break
    n_chunks = D // TD

    bytes_accessed = 2 * B * C * HW * in_item + B * 2 * C * D * HW * out_item
    kernel = functools.partial(
        _cost_builder_kernel, W=W, HW=HW, TD=TD, n_chunks=n_chunks)

    out = pl.pallas_call(
        kernel,
        out_shape=jax.ShapeDtypeStruct((B, 2, C, D * HW), out_dtype),
        grid=(B, n_chunks),
        in_specs=[
            # Input block index is independent of the chunk axis -> the
            # pipeline keeps the features resident in VMEM across chunks.
            pl.BlockSpec((pl.Squeezed(), C, HW), lambda b, dc: (b, 0, 0)),
            pl.BlockSpec((pl.Squeezed(), C, HW), lambda b, dc: (b, 0, 0)),
        ],
        out_specs=pl.BlockSpec(
            (pl.Squeezed(), 2, C, TD * HW), lambda b, dc: (b, 0, 0, dc)
        ),
        compiler_params=pltpu.CompilerParams(
            dimension_semantics=("parallel", "parallel"),
        ),
        cost_estimate=pl.CostEstimate(
            flops=0, transcendentals=0, bytes_accessed=bytes_accessed
        ),
    )(left2, right2)

    # (B, 2, C, D*H*W) and (B, 2C, D, H, W) share the same row-major byte
    # order, so this reshape is a free bitcast.
    return out.reshape(B, 2 * C, D, H, W)


class CostBuilder:
    """JAX/Pallas counterpart of the PyTorch CostBuilder module (no params)."""

    def __init__(self, max_disp):
        self.max_disp = max_disp
        self._fwd = jax.jit(
            functools.partial(cost_builder_forward, max_disp=max_disp)
        )

    def __call__(self, left_feats, right_feats):
        return self._fwd(left_feats, right_feats)


if __name__ == "__main__":
    key = jax.random.PRNGKey(0)
    k1, k2 = jax.random.split(key)

    B, C, H, W = 2, 4, 16, 16
    max_disp = 16  # -> D = 4 disparity levels
    left = jax.random.normal(k1, (B, C, H, W), dtype=jnp.float32)
    right = jax.random.normal(k2, (B, C, H, W), dtype=jnp.float32)

    module = CostBuilder(max_disp)
    cost = module(left, right)
    cost = jax.block_until_ready(cost)

    # Pure-numpy reference mirroring the PyTorch loop exactly.
    D = max_disp // 4
    l = np.asarray(left)
    r = np.asarray(right)
    ref = np.zeros((B, 2 * C, D, H, W), dtype=np.float32)
    for i in range(D):
        if i == 0:
            ref[:, :C, 0, :, :] = l
            ref[:, C:, 0, :, :] = r
        else:
            ref[:, :C, i, :, i:] = l[:, :, :, i:]
            ref[:, C:, i, :, i:] = r[:, :, :, :-i]

    assert cost.shape == (B, 2 * C, D, H, W), cost.shape
    assert cost.dtype == jnp.float32, cost.dtype
    assert np.array_equal(np.asarray(cost), ref), "Pallas CostBuilder mismatch"

    print("KERNEL_OK")
</pallas_src>

<mosaic_0001>
module attributes {stable_mosaic.version = 11 : i64} {
  func.func @_cost_builder_kernel(%arg0: i32, %arg1: i32, %arg2: memref<1x4x256xf32, #tpu.memory_space<vmem>>, %arg3: memref<1x4x256xf32, #tpu.memory_space<vmem>>, %arg4: memref<1x2x4x1024xf32, #tpu.memory_space<vmem>>) attributes {dimension_semantics = [#tpu.dimension_semantics<parallel>, #tpu.dimension_semantics<parallel>], iteration_bounds = array<i64: 2, 1>, scalar_prefetch = 0 : i64, scratch_operands = 0 : i64, tpu.core_type = #tpu.core_type<tc>, window_params = [{transform_indices = @transform_0, window_bounds = array<i64: 1, 4, 256>}, {transform_indices = @transform_1, window_bounds = array<i64: 1, 4, 256>}, {transform_indices = @transform_2, window_bounds = array<i64: 1, 2, 4, 1024>}]} {
    %c0 = arith.constant 0 : index
    %c0_0 = arith.constant 0 : index
    %c0_1 = arith.constant 0 : index
    %0 = vector.load %arg2[%c0, %c0_0, %c0_1] : memref<1x4x256xf32, #tpu.memory_space<vmem>>, vector<1x4x256xf32>
    %1 = vector.shape_cast %0 : vector<1x4x256xf32> to vector<4x256xf32>
    %c0_2 = arith.constant 0 : index
    %c0_3 = arith.constant 0 : index
    %c0_4 = arith.constant 0 : index
    %2 = vector.load %arg3[%c0_2, %c0_3, %c0_4] : memref<1x4x256xf32, #tpu.memory_space<vmem>>, vector<1x4x256xf32>
    %3 = vector.shape_cast %2 : vector<1x4x256xf32> to vector<4x256xf32>
    %4 = tpu.iota {dimensions = array<i32: 1>} : vector<4x256xi32>
    %c16_i32 = arith.constant 16 : i32
    %c0_i32 = arith.constant 0 : i32
    %5 = arith.cmpi eq, %c16_i32, %c0_i32 : i32
    %c1_i32 = arith.constant 1 : i32
    %6 = arith.select %5, %c1_i32, %c16_i32 : i32
    %7 = vector.broadcast %6 : i32 to vector<4x256xi32>
    %8 = arith.remsi %4, %7 : vector<4x256xi32>
    %c0_i32_5 = arith.constant 0 : i32
    %9 = vector.broadcast %c0_i32_5 : i32 to vector<4x256xi32>
    %10 = arith.cmpi ne, %8, %9 : vector<4x256xi32>
    %c0_i32_6 = arith.constant 0 : i32
    %11 = vector.broadcast %c0_i32_6 : i32 to vector<4x256xi32>
    %12 = arith.cmpi slt, %8, %11 : vector<4x256xi32>
    %c0_i32_7 = arith.constant 0 : i32
    %13 = arith.cmpi slt, %6, %c0_i32_7 : i32
    %14 = vector.broadcast %13 : i1 to vector<4x256xi1>
    %15 = vector.broadcast %14 : vector<4x256xi1> to vector<4x256xi1>
    %16 = arith.xori %12, %15 : vector<4x256xi1>
    %17 = arith.andi %16, %10 : vector<4x256xi1>
    %18 = vector.broadcast %6 : i32 to vector<4x256xi32>
    %19 = arith.addi %8, %18 : vector<4x256xi32>
    %20 = arith.select %17, %19, %8 : vector<4x256xi1>, vector<4x256xi32>
    %c0_8 = arith.constant 0 : index
    %c0_9 = arith.constant 0 : index
    %c0_10 = arith.constant 0 : index
    %c0_11 = arith.constant 0 : index
    %21 = vector.load %arg4[%c0_8, %c0_9, %c0_10, %c0_11] : memref<1x2x4x1024xf32, #tpu.memory_space<vmem>>, vector<1x1x4x256xf32>
    %22 = vector.shape_cast %21 : vector<1x1x4x256xf32> to vector<4x256xf32>
    %23 = vector.shape_cast %1 : vector<4x256xf32> to vector<1x1x4x256xf32>
    tpu.vector_store %arg4[%c0_8, %c0_9, %c0_10, %c0_11], %23 {strides = array<i32>} : memref<1x2x4x1024xf32, #tpu.memory_space<vmem>>, vector<1x1x4x256xf32>,
    %c0_12 = arith.constant 0 : index
    %c1 = arith.constant 1 : index
    %c0_13 = arith.constant 0 : index
    %c0_14 = arith.constant 0 : index
    %24 = vector.load %arg4[%c0_12, %c1, %c0_13, %c0_14] : memref<1x2x4x1024xf32, #tpu.memory_space<vmem>>, vector<1x1x4x256xf32>
    %25 = vector.shape_cast %24 : vector<1x1x4x256xf32> to vector<4x256xf32>
    %26 = vector.shape_cast %3 : vector<4x256xf32> to vector<1x1x4x256xf32>
    tpu.vector_store %arg4[%c0_12, %c1, %c0_13, %c0_14], %26 {strides = array<i32>} : memref<1x2x4x1024xf32, #tpu.memory_space<vmem>>, vector<1x1x4x256xf32>,
    %c1_i32_15 = arith.constant 1 : i32
    %27 = vector.broadcast %c1_i32_15 : i32 to vector<4x256xi32>
    %28 = arith.cmpi sge, %20, %27 : vector<4x256xi32>
    %c1_i32_16 = arith.constant 1 : i32
    %29 = tpu.dynamic_rotate %3 by %c1_i32_16 dim 1 : vector<4x256xf32>, i32 -> vector<4x256xf32>
    %cst = arith.constant 0.000000e+00 : f32
    %30 = vector.broadcast %cst : f32 to vector<4x256xf32>
    %31 = arith.select %28, %1, %30 : vector<4x256xi1>, vector<4x256xf32>
    %c0_17 = arith.constant 0 : index
    %c0_18 = arith.constant 0 : index
    %c0_19 = arith.constant 0 : index
    %c256 = arith.constant 256 : index
    %32 = vector.load %arg4[%c0_17, %c0_18, %c0_19, %c256] : memref<1x2x4x1024xf32, #tpu.memory_space<vmem>>, vector<1x1x4x256xf32>
    %33 = vector.shape_cast %32 : vector<1x1x4x256xf32> to vector<4x256xf32>
    %34 = vector.shape_cast %31 : vector<4x256xf32> to vector<1x1x4x256xf32>
    tpu.vector_store %arg4[%c0_17, %c0_18, %c0_19, %c256], %34 {strides = array<i32>} : memref<1x2x4x1024xf32, #tpu.memory_space<vmem>>, vector<1x1x4x256xf32>,
    %cst_20 = arith.constant 0.000000e+00 : f32
    %35 = vector.broadcast %cst_20 : f32 to vector<4x256xf32>
    %36 = arith.select %28, %29, %35 : vector<4x256xi1>, vector<4x256xf32>
    %c0_21 = arith.constant 0 : index
    %c1_22 = arith.constant 1 : index
    %c0_23 = arith.constant 0 : index
    %c256_24 = arith.constant 256 : index
    %37 = vector.load %arg4[%c0_21, %c1_22, %c0_23, %c256_24] : memref<1x2x4x1024xf32, #tpu.memory_space<vmem>>, vector<1x1x4x256xf32>
    %38 = vector.shape_cast %37 : vector<1x1x4x256xf32> to vector<4x256xf32>
    %39 = vector.shape_cast %36 : vector<4x256xf32> to vector<1x1x4x256xf32>
    tpu.vector_store %arg4[%c0_21, %c1_22, %c0_23, %c256_24], %39 {strides = array<i32>} : memref<1x2x4x1024xf32, #tpu.memory_space<vmem>>, vector<1x1x4x256xf32>,
    %c2_i32 = arith.constant 2 : i32
    %40 = vector.broadcast %c2_i32 : i32 to vector<4x256xi32>
    %41 = arith.cmpi sge, %20, %40 : vector<4x256xi32>
    %c2_i32_25 = arith.constant 2 : i32
    %42 = tpu.dynamic_rotate %3 by %c2_i32_25 dim 1 : vector<4x256xf32>, i32 -> vector<4x256xf32>
    %cst_26 = arith.constant 0.000000e+00 : f32
    %43 = vector.broadcast %cst_26 : f32 to vector<4x256xf32>
    %44 = arith.select %41, %1, %43 : vector<4x256xi1>, vector<4x256xf32>
    %c0_27 = arith.constant 0 : index
    %c0_28 = arith.constant 0 : index
    %c0_29 = arith.constant 0 : index
    %c512 = arith.constant 512 : index
    %45 = vector.load %arg4[%c0_27, %c0_28, %c0_29, %c512] : memref<1x2x4x1024xf32, #tpu.memory_space<vmem>>, vector<1x1x4x256xf32>
    %46 = vector.shape_cast %45 : vector<1x1x4x256xf32> to vector<4x256xf32>
    %47 = vector.shape_cast %44 : vector<4x256xf32> to vector<1x1x4x256xf32>
    tpu.vector_store %arg4[%c0_27, %c0_28, %c0_29, %c512], %47 {strides = array<i32>} : memref<1x2x4x1024xf32, #tpu.memory_space<vmem>>, vector<1x1x4x256xf32>,
    %cst_30 = arith.constant 0.000000e+00 : f32
    %48 = vector.broadcast %cst_30 : f32 to vector<4x256xf32>
    %49 = arith.select %41, %42, %48 : vector<4x256xi1>, vector<4x256xf32>
    %c0_31 = arith.constant 0 : index
    %c1_32 = arith.constant 1 : index
    %c0_33 = arith.constant 0 : index
    %c512_34 = arith.constant 512 : index
    %50 = vector.load %arg4[%c0_31, %c1_32, %c0_33, %c512_34] : memref<1x2x4x1024xf32, #tpu.memory_space<vmem>>, vector<1x1x4x256xf32>
    %51 = vector.shape_cast %50 : vector<1x1x4x256xf32> to vector<4x256xf32>
    %52 = vector.shape_cast %49 : vector<4x256xf32> to vector<1x1x4x256xf32>
    tpu.vector_store %arg4[%c0_31, %c1_32, %c0_33, %c512_34], %52 {strides = array<i32>} : memref<1x2x4x1024xf32, #tpu.memory_space<vmem>>, vector<1x1x4x256xf32>,
    %c3_i32 = arith.constant 3 : i32
    %53 = vector.broadcast %c3_i32 : i32 to vector<4x256xi32>
    %54 = arith.cmpi sge, %20, %53 : vector<4x256xi32>
    %c3_i32_35 = arith.constant 3 : i32
    %55 = tpu.dynamic_rotate %3 by %c3_i32_35 dim 1 : vector<4x256xf32>, i32 -> vector<4x256xf32>
    %cst_36 = arith.constant 0.000000e+00 : f32
    %56 = vector.broadcast %cst_36 : f32 to vector<4x256xf32>
    %57 = arith.select %54, %1, %56 : vector<4x256xi1>, vector<4x256xf32>
    %c0_37 = arith.constant 0 : index
    %c0_38 = arith.constant 0 : index
    %c0_39 = arith.constant 0 : index
    %c768 = arith.constant 768 : index
    %58 = vector.load %arg4[%c0_37, %c0_38, %c0_39, %c768] : memref<1x2x4x1024xf32, #tpu.memory_space<vmem>>, vector<1x1x4x256xf32>
    %59 = vector.shape_cast %58 : vector<1x1x4x256xf32> to vector<4x256xf32>
    %60 = vector.shape_cast %57 : vector<4x256xf32> to vector<1x1x4x256xf32>
    tpu.vector_store %arg4[%c0_37, %c0_38, %c0_39, %c768], %60 {strides = array<i32>} : memref<1x2x4x1024xf32, #tpu.memory_space<vmem>>, vector<1x1x4x256xf32>,
    %cst_40 = arith.constant 0.000000e+00 : f32
    %61 = vector.broadcast %cst_40 : f32 to vector<4x256xf32>
    %62 = arith.select %54, %55, %61 : vector<4x256xi1>, vector<4x256xf32>
    %c0_41 = arith.constant 0 : index
    %c1_42 = arith.constant 1 : index
    %c0_43 = arith.constant 0 : index
    %c768_44 = arith.constant 768 : index
    %63 = vector.load %arg4[%c0_41, %c1_42, %c0_43, %c768_44] : memref<1x2x4x1024xf32, #tpu.memory_space<vmem>>, vector<1x1x4x256xf32>
    %64 = vector.shape_cast %63 : vector<1x1x4x256xf32> to vector<4x256xf32>
    %65 = vector.shape_cast %62 : vector<4x256xf32> to vector<1x1x4x256xf32>
    tpu.vector_store %arg4[%c0_41, %c1_42, %c0_43, %c768_44], %65 {strides = array<i32>} : memref<1x2x4x1024xf32, #tpu.memory_space<vmem>>, vector<1x1x4x256xf32>,
    return
  }
  func.func @transform_0(%arg0: i32, %arg1: i32) -> (i32, i32, i32) {
    %c0_i32 = arith.constant 0 : i32
    %c0_i32_0 = arith.constant 0 : i32
    %c0_i32_1 = arith.constant 0 : i32
    return %arg0, %c0_i32, %c0_i32_0 : i32, i32, i32
  }
  func.func @transform_1(%arg0: i32, %arg1: i32) -> (i32, i32, i32) {
    %c0_i32 = arith.constant 0 : i32
    %c0_i32_0 = arith.constant 0 : i32
    %c0_i32_1 = arith.constant 0 : i32
    return %arg0, %c0_i32, %c0_i32_0 : i32, i32, i32
  }
  func.func @transform_2(%arg0: i32, %arg1: i32) -> (i32, i32, i32, i32) {
    %c0_i32 = arith.constant 0 : i32
    %c0_i32_0 = arith.constant 0 : i32
    %c0_i32_1 = arith.constant 0 : i32
    return %arg0, %c0_i32, %c0_i32_0, %arg1 : i32, i32, i32, i32
  }
}

</mosaic_0001>

<llo_original>
// kernel: cost_builder_forward.1
$region0: #{cost_builder_forward.1}
  #allocation0 [shape = 'u32[]', space=smem, size = 0x4, offset = 0x4, fixed_abs, tag = 'smem constant byte address 0x4 - core index']
  #allocation1 [shape = 'u32[144,128]{1,0:T(1,128)}', space=vmem, size = 0x12000, scoped, tag = 'internal scratch']
  %s0 = inlined_call_operand.vmem [shape: f32[2,4,256], index: 0, kind: input, shape index: {}]
  %s1 = inlined_call_operand.vmem [shape: f32[2,4,256], index: 1, kind: input, shape index: {}]
  %s2 = inlined_call_operand.vmem [shape: f32[2,2,4,1024], index: 2, kind: output, shape index: {}]
  %s3 = sld [smem:[#allocation0]]
  $region41: #{cost_builder_forward.1} parent=0
    _
  %s5 = ssub.s32 1, %s3
  %s6 = scalar_select 0, %s5, %s3
  loop: start=0, step=1, limit=4
  $region2: #{cost_builder_forward.1} parent=0 // loop_pre_header
    _
  $region3: #{cost_builder_forward.1} parent=0 // loop_header
    %s8 = sphi 0, %s12
    %p9 = scmp.ge.s32.totalorder %s8, 4
    %s15 = sphi 0, %s27
    %s16 = sphi 0, %s23
    %s17 = sphi 0, %s15
    %s18 = sphi 0, %s16
    %s19 = sphi 0, %s17
    %s20 = sphi 0, %s18
    %s30 = sphi 0, %s32
    %s33 = sphi 0, %s30
    %s34 = sphi 0, %s33
    %s50 = sphi 0, %s34
    %s56 = sphi 0, %s58
    %s59 = sphi 0, %s56
    %s60 = sphi 0, %s59
    %s76 = sphi 0, %s60
    %s84 = sphi 0, %s86
    %s87 = sphi 0, %s84
    %s88 = sphi 0, %s87
    %s104 = sphi 0, %s88
  $region4: #{cost_builder_forward.1} parent=0 // loop_header_branch
    %11 = sbr.rel (%p9) target = $region8
  $region5: #{cost_builder_forward.1} parent=0 // loop_body
    %s13 = ssub.s32 %s8, 1
    %s14 = ssub.s32 %s8, 2
    %s21 = sadd.s32 1, %s16
    %p22 = scmp.ge.s32.totalorder %s21, 1
    %s23 = scalar_select %p22, 0, %s21
    %s24 = sadd.s32 1, %s15
    %s25 = scalar_select %p22, %s24, %s15
    %p26 = scmp.ge.s32.totalorder %s25, 2
    %s27 = scalar_select %p26, 0, %s25
    %s28 = ssub.s32 %s15, %s27
    %p29 = scmp.eq.s32.totalorder %s28, 0
    %s31 = sadd.s32 %s30, 1
    %s32 = scalar_select %p29, %s30, %s31
    %p35 = pneg %p29
    %p36 = scmp.eq.s32.totalorder %s8, 1
    %p37 = por %p35, %p36
    %p38 = scmp.ne.s32.totalorder %s30, %s33
    %p39 = scmp.eq.s32.totalorder %s8, 0
    %p40 = por %p38, %p39
    %p41 = scmp.ne.s32.totalorder %s30, %s33
    %p42 = scmp.eq.s32.totalorder %s13, 1
    %p43 = por %p41, %p42
    %p44 = scmp.ne.s32.totalorder %s33, %s34
    %p45 = scmp.eq.s32.totalorder %s13, 0
    %p46 = por %p44, %p45
    %p47 = scmp.ne.s32.totalorder %s33, %s34
    %p48 = scmp.eq.s32.totalorder %s14, 1
    %p49 = por %p47, %p48
    %p51 = scmp.ne.s32.totalorder %s34, %s50
    %p52 = scmp.eq.s32.totalorder %s14, 0
    %p53 = por %p51, %p52
    %s54 = ssub.s32 %s15, %s27
    %p55 = scmp.eq.s32.totalorder %s54, 0
    %s57 = sadd.s32 %s56, 1
    %s58 = scalar_select %p55, %s56, %s57
    %p61 = pneg %p55
    %p62 = scmp.eq.s32.totalorder %s8, 1
    %p63 = por %p61, %p62
    %p64 = scmp.ne.s32.totalorder %s56, %s59
    %p65 = scmp.eq.s32.totalorder %s8, 0
    %p66 = por %p64, %p65
    %p67 = scmp.ne.s32.totalorder %s56, %s59
    %p68 = scmp.eq.s32.totalorder %s13, 1
    %p69 = por %p67, %p68
    %p70 = scmp.ne.s32.totalorder %s59, %s60
    %p71 = scmp.eq.s32.totalorder %s13, 0
    %p72 = por %p70, %p71
    %p73 = scmp.ne.s32.totalorder %s59, %s60
    %p74 = scmp.eq.s32.totalorder %s14, 1
    %p75 = por %p73, %p74
    %p77 = scmp.ne.s32.totalorder %s60, %s76
    %p78 = scmp.eq.s32.totalorder %s14, 0
    %p79 = por %p77, %p78
    %s80 = ssub.s32 %s15, %s27
    %s81 = ssub.s32 %s16, %s23
    %s82 = sor.u32 %s80, %s81
    %p83 = scmp.eq.s32.totalorder %s82, 0
    %s85 = sadd.s32 %s84, 1
    %s86 = scalar_select %p83, %s84, %s85
    %p89 = pneg %p83
    %p90 = scmp.eq.s32.totalorder %s8, 1
    %p91 = por %p89, %p90
    %p92 = scmp.ne.s32.totalorder %s84, %s87
    %p93 = scmp.eq.s32.totalorder %s8, 0
    %p94 = por %p92, %p93
    %p95 = scmp.ne.s32.totalorder %s84, %s87
    %p96 = scmp.eq.s32.totalorder %s13, 1
    %p97 = por %p95, %p96
    %p98 = scmp.ne.s32.totalorder %s87, %s88
    %p99 = scmp.eq.s32.totalorder %s13, 0
    %p100 = por %p98, %p99
    %p101 = scmp.ne.s32.totalorder %s87, %s88
    %p102 = scmp.eq.s32.totalorder %s14, 1
    %p103 = por %p101, %p102
    %p105 = scmp.ne.s32.totalorder %s88, %s104
    %p106 = scmp.eq.s32.totalorder %s14, 0
    %p107 = por %p105, %p106
    %p108 = scmp.le.s32.totalorder 1, %s8
    %p109 = scmp.lt.s32.totalorder %s8, 3
    %p110 = pnand %p108, %p109
    %p111 = pneg %p110
    // Predicated region
    $region9: #{cost_builder_forward.1} parent=5 // pred_check
      _
    $region10: #{cost_builder_forward.1} parent=5 // pred_check_branch
      %113 = sbr.rel (%p110) target = $region12
    $region11: #{cost_builder_forward.1} parent=5 // pred_region
      %s114 = ssub.s32 %s8, 1
    $region12: #{cost_builder_forward.1} parent=5 // pred_fallthru
      _
    %p115 = scmp.lt.s32.totalorder %s8, 2
    // Predicated region
    $region13: #{cost_builder_forward.1} parent=5 // pred_check
      %p116 = pneg %p115
    $region14: #{cost_builder_forward.1} parent=5 // pred_check_branch
      %118 = sbr.rel (%p116) target = $region16
    $region15: #{cost_builder_forward.1} parent=5 // pred_region
      // Predicated region
      $region17: #{cost_builder_forward.1} parent=15 // pred_check
        %p119 = pneg %p40
      $region18: #{cost_builder_forward.1} parent=15 // pred_check_branch
        %121 = sbr.rel (%p119) target = $region20
      $region19: #{cost_builder_forward.1} parent=15 // pred_region
        %p122 = scmp.lt.s32.totalorder %s15, 1
        %s123 = scalar_select %p122, %s15, 1
        %s124 = smul.addr %s123, 2
        %s125 = smul.addr %s124, 4
        %s126 = scalar_lea.vmem %s0, %s125
      $region20: #{cost_builder_forward.1} parent=15 // pred_fallthru
        _
      // Predicated region
      $region21: #{cost_builder_forward.1} parent=15 // pred_check
        %p127 = pneg %p66
      $region22: #{cost_builder_forward.1} parent=15 // pred_check_branch
        %129 = sbr.rel (%p127) target = $region24
      $region23: #{cost_builder_forward.1} parent=15 // pred_region
        %p130 = scmp.lt.s32.totalorder %s15, 1
        %s131 = scalar_select %p130, %s15, 1
        %s132 = smul.addr %s131, 2
        %s133 = smul.addr %s132, 4
        %s134 = scalar_lea.vmem %s1, %s133
      $region24: #{cost_builder_forward.1} parent=15 // pred_fallthru
        _
    $region16: #{cost_builder_forward.1} parent=5 // pred_fallthru
      _
    %p135 = scmp.le.s32.totalorder 1, %s8
    %p136 = scmp.lt.s32.totalorder %s8, 3
    %p137 = pnand %p135, %p136
    %p138 = pneg %p137
    // Predicated region
    $region25: #{cost_builder_forward.1} parent=5 // pred_check
      _
    $region26: #{cost_builder_forward.1} parent=5 // pred_check_branch
      %140 = sbr.rel (%p137) target = $region28
    $region27: #{cost_builder_forward.1} parent=5 // pred_region
      %s141 = ssub.s32 %s8, 1
      %p142 = scmp.lt.s32.totalorder %s17, 1
      %s143 = scalar_select %p142, %s17, 1
      %s144 = smul.addr %s143, 2
      %s145 = smul.addr %s144, 4
      %s146 = scalar_lea.vmem %s0, %s145
      %p147 = pneg %p46
      %p148 = pneg %p43
      %p149 = scmp.lt.s32.totalorder %s17, 1
      %s150 = scalar_select %p149, %s17, 1
      %s151 = smul.addr %s150, 2
      %s152 = smul.addr %s151, 4
      %s153 = scalar_lea.vmem %s1, %s152
      %p154 = pneg %p72
      %p155 = pneg %p69
      %p156 = pneg %p100
      %p157 = pneg %p97
      %s158 = smul.u32 8, %s18
      %p159 = scmp.lt.s32.totalorder %s17, 1
      %s160 = scalar_select %p159, %s17, 1
      %p161 = scmp.lt.s32.totalorder %s158, 7
      %s162 = scalar_select %p161, %s158, 7
      %s163 = smul.addr %s160, 16
      %s164 = sadd.s32 %s162, %s163
      %s165 = smul.addr %s164, 4
      %s166 = scalar_lea.vmem %s2, %s165
      %p167 = scmp.lt.s32.totalorder %s17, 1
      %s168 = scalar_select %p167, %s17, 1
      %s169 = smul.addr %s168, 2
      %s170 = smul.addr %s169, 4
      %s171 = scalar_lea.vmem %s0, %s170
      %p172 = scmp.lt.s32.totalorder %s17, 1
      %s173 = scalar_select %p172, %s17, 1
      %s174 = smul.addr %s173, 2
      %s175 = smul.addr %s174, 4
      %s176 = scalar_lea.vmem %s1, %s175
      %s177 = smul.u32 8, %s18
      %p178 = scmp.lt.s32.totalorder %s17, 1
      %s179 = scalar_select %p178, %s17, 1
      %p180 = scmp.lt.s32.totalorder %s177, 7
      %s181 = scalar_select %p180, %s177, 7
      %s182 = smul.addr %s179, 16
      %s183 = sadd.s32 %s181, %s182
      %s184 = smul.addr %s183, 4
      %s185 = scalar_lea.vmem %s2, %s184
      %s186 = smul.u32 8, %s18
      %v187 = vld [vmem:[%s171] sm:$0xff]
      %v188 = vld [vmem:[%s176] sm:$0xff]
      %v189 = vlaneseq
      %v190 = vand.u32 %v189, 127
      %v191 = vadd.s32 %v190, 128
      %vm192 = vcmp.lt.s32.totalorder %v190, 0
      %v193 = vsub.s32 0, %v190
      %v194 = vsel %vm192, %v193, %v190
      %v195 = vshrl.u32 %v194, 4
      %v196 = vand.u32 %v194, 15
      %v197 = vsub.s32 0, %v196
      %v198 = vsel %vm192, %v197, %v196
      %vm199 = vcmp.lt.s32.totalorder %v191, 0
      %v200 = vsub.s32 0, %v191
      %v201 = vsel %vm199, %v200, %v191
      %v202 = vshrl.u32 %v201, 4
      %v203 = vand.u32 %v201, 15
      %v204 = vsub.s32 0, %v203
      %v205 = vsel %vm199, %v204, %v203
      %vm206 = vcmp.ne.s32.totalorder %v198, 0
      %vm207 = vcmp.ne.s32.totalorder %v205, 0
      %vm208 = vcmp.lt.s32.totalorder %v198, 0
      %vm209 = vcmp.lt.s32.totalorder %v205, 0
      %vm210 = vmand %vm208, %vm206
      %vm211 = vmand %vm209, %vm207
      %v212 = vadd.s32 %v198, 16
      %v213 = vadd.s32 %v205, 16
      %v214 = vsel %vm210, %v212, %v198
      %v215 = vsel %vm211, %v213, %v205
      %216 = vst [vmem:[%s185] sm:$0xff] %v187
      %s217 = scalar_lea.vmem %s185, 32
      %218 = vst [vmem:[%s217] sm:$0xff] %v188
      %vm219 = vcmp.ge.s32.totalorder %v214, 1
      %vm220 = vcmp.ge.s32.totalorder %v215, 1
      %v222 = vcombine.high %v188, %v188
      %224 = vrot.lane.b32.xlu0 %v188, 1
      %v225 = vpop.permute.xlu0 %224
      %226 = vrot.lane.b32.xlu0 %v222, 1
      %v227 = vpop.permute.xlu0 %226
      %vm228 = vcmp.lt.s32.totalorder %v190, 1
      %v229 = vsel %vm228, %v225, %v227
      %v230 = vsel %vm228, %v227, %v225
      %v232 = vcombine.high %v187, %v187
      %v234 = vsel %vm219, %v187, 0.0
      %v235 = vsel %vm220, %v232, 0.0
      %v238 = vcombine.low %v234, %v235
      %240 = vst [vmem:[%s185 + $0x8] sm:$0xff] %v238
      %v241 = vsel %vm219, %v230, 0.0
      %v242 = vsel %vm220, %v229, 0.0
      %v245 = vcombine.low %v241, %v242
      %247 = vst [vmem:[%s217 + $0x8] sm:$0xff] %v245
      %vm248 = vcmp.ge.s32.totalorder %v214, 2
      %vm249 = vcmp.ge.s32.totalorder %v215, 2
      %250 = vrot.lane.b32.xlu0 %v188, 2
      %v251 = vpop.permute.xlu0 %250
      %252 = vrot.lane.b32.xlu0 %v222, 2
      %v253 = vpop.permute.xlu0 %252
      %vm254 = vcmp.lt.s32.totalorder %v190, 2
      %v255 = vsel %vm254, %v251, %v253
      %v256 = vsel %vm254, %v253, %v251
      %v257 = vsel %vm248, %v187, 0.0
      %v258 = vsel %vm249, %v232, 0.0
      %v261 = vcombine.low %v257, %v258
      %263 = vst [vmem:[%s185 + $0x10] sm:$0xff] %v261
      %v264 = vsel %vm248, %v256, 0.0
      %v265 = vsel %vm249, %v255, 0.0
      %v268 = vcombine.low %v264, %v265
      %270 = vst [vmem:[%s217 + $0x10] sm:$0xff] %v268
      %vm271 = vcmp.ge.s32.totalorder %v214, 3
      %vm272 = vcmp.ge.s32.totalorder %v215, 3
      %273 = vrot.lane.b32.xlu0 %v188, 3
      %v274 = vpop.permute.xlu0 %273
      %275 = vrot.lane.b32.xlu0 %v222, 3
      %v276 = vpop.permute.xlu0 %275
      %vm277 = vcmp.lt.s32.totalorder %v190, 3
      %v278 = vsel %vm277, %v274, %v276
      %v279 = vsel %vm277, %v276, %v274
      %v280 = vsel %vm271, %v187, 0.0
      %v281 = vsel %vm272, %v232, 0.0
      %v284 = vcombine.low %v280, %v281
      %286 = vst [vmem:[%s185 + $0x18] sm:$0xff] %v284
      %v287 = vsel %vm271, %v279, 0.0
      %v288 = vsel %vm272, %v278, 0.0
      %v291 = vcombine.low %v287, %v288
      %293 = vst [vmem:[%s217 + $0x18] sm:$0xff] %v291
      %s294 = smul.u32 8, %s18
      %p295 = scmp.lt.s32.totalorder %s17, 1
      %s296 = scalar_select %p295, %s17, 1
      %p297 = scmp.lt.s32.totalorder %s294, 7
      %s298 = scalar_select %p297, %s294, 7
      %s299 = smul.addr %s296, 16
      %s300 = sadd.s32 %s298, %s299
      %s301 = smul.addr %s300, 4
      %s302 = scalar_lea.vmem %s2, %s301
      // Predicated region
      $region29: #{cost_builder_forward.1} parent=27 // pred_check
        %p303 = pneg %p97
      $region30: #{cost_builder_forward.1} parent=27 // pred_check_branch
        %305 = sbr.rel (%p303) target = $region32
      $region31: #{cost_builder_forward.1} parent=27 // pred_region
        %s306 = smul.u32 8, %s18
      $region32: #{cost_builder_forward.1} parent=27 // pred_fallthru
        _
    $region28: #{cost_builder_forward.1} parent=5 // pred_fallthru
      _
    %p307 = scmp.le.s32.totalorder 2, %s8
    // Predicated region
    $region33: #{cost_builder_forward.1} parent=5 // pred_check
      %p308 = pneg %p307
    $region34: #{cost_builder_forward.1} parent=5 // pred_check_branch
      %310 = sbr.rel (%p308) target = $region36
    $region35: #{cost_builder_forward.1} parent=5 // pred_region
      %s311 = ssub.s32 %s8, 2
      // Predicated region
      $region37: #{cost_builder_forward.1} parent=35 // pred_check
        %p312 = pneg %p103
      $region38: #{cost_builder_forward.1} parent=35 // pred_check_branch
        %314 = sbr.rel (%p312) target = $region40
      $region39: #{cost_builder_forward.1} parent=35 // pred_region
        %s315 = smul.u32 8, %s20
        %p316 = scmp.lt.s32.totalorder %s19, 1
        %s317 = scalar_select %p316, %s19, 1
        %p318 = scmp.lt.s32.totalorder %s315, 7
        %s319 = scalar_select %p318, %s315, 7
        %s320 = smul.addr %s317, 16
        %s321 = sadd.s32 %s319, %s320
        %s322 = smul.addr %s321, 4
        %s323 = scalar_lea.vmem %s2, %s322
      $region40: #{cost_builder_forward.1} parent=35 // pred_fallthru
        _
    $region36: #{cost_builder_forward.1} parent=5 // pred_fallthru
      _
  $region6: #{cost_builder_forward.1} parent=0 // loop_footer
    %s12 = sadd.s32 1, %s8
  $region7: #{cost_builder_forward.1} parent=0 // loop_footer_branch
    %7 = sbr.rel target = $region3
  $region8: #{cost_builder_forward.1} parent=0 // loop_exit
    _

</llo_original>
